<compile_context>
chip_gen: v7x
topology: tpu7x:2x2x1
jax: 0.10.0
libtpu: 0.0.40
codegen_flags: <defaults>
</compile_context>

<pallas_src>
import jax
import jax.numpy as jnp
from jax.experimental import pallas as pl
from jax.experimental.pallas import tpu as pltpu

_LANE_WIDTH = 1024              # 8 * 128 lanes -> lane-dense rows, unmasked vst
_LANES = 128
_TILE_BYTES = 4 * 1024 * 1024   # per-array per-tile; x2 arrays x2 buffers = 16 MiB VMEM
_TILE_ELEMS_1D = 128 * 1024     # modest blocks for the rare fully-unaligned path
_VMEM_LIMIT = 32 * 1024 * 1024  # above v5e's 16 MiB scoped default, below v7x physical


def _binary_tanh_kernel(x_ref, o_ref):
    one = jnp.ones((), o_ref.dtype)
    # sign(tanh(x)) thresholded at 0 == (x >= 0 ? +1 : -1); matches the PyTorch
    # forward exactly (x == 0 -> +1).
    o_ref[...] = jnp.where(x_ref[...] >= 0, one, -one)


def _streaming_call(x_slab, block_shape, grid, n_elems, itemsize):
    index_map = (lambda i: (i, 0)) if len(block_shape) == 2 else (lambda i: (i,))
    blk = pl.BlockSpec(block_shape, index_map)
    return pl.pallas_call(
        _binary_tanh_kernel,
        out_shape=jax.ShapeDtypeStruct(x_slab.shape, x_slab.dtype),
        grid_spec=pltpu.PrefetchScalarGridSpec(
            num_scalar_prefetch=0, grid=grid, in_specs=[blk], out_specs=blk),
        compiler_params=pltpu.CompilerParams(
            dimension_semantics=("parallel",),
            vmem_limit_bytes=_VMEM_LIMIT),
        cost_estimate=pl.CostEstimate(
            flops=n_elems, transcendentals=0,
            bytes_accessed=2 * n_elems * itemsize),
    )(x_slab)


def _binary_tanh_forward(x):
    orig_shape = x.shape
    flat = x.reshape(-1)
    n = flat.shape[0]
    itemsize = jnp.dtype(x.dtype).itemsize
    packing = 8 * max(1, 4 // itemsize)          # sublane packing: 8 f32 / 16 bf16 / 32 int8

    lane_width = None
    if n % _LANE_WIDTH == 0:
        lane_width = _LANE_WIDTH
    elif n % _LANES == 0:
        lane_width = _LANES

    if lane_width is not None:
        rows = n // lane_width
        tile_rows = max(packing,
                        (_TILE_BYTES // (lane_width * itemsize)) // packing * packing)
        tile_rows = min(tile_rows, rows)         # block == full row extent when small (legal)
        x2d = flat.reshape(rows, lane_width)     # no padding: ragged last block is masked
        y2d = _streaming_call(x2d, (tile_rows, lane_width),
                              (pl.cdiv(rows, tile_rows),), n, itemsize)
        return y2d.reshape(orig_shape)

    # Fully unaligned numel (rare): run on the raw flat array; Pallas masks the
    # ragged last block.  No pad, no output slice.
    tile = min(n, _TILE_ELEMS_1D)
    y = _streaming_call(flat, (tile,), (pl.cdiv(n, tile),), n, itemsize)
    return y.reshape(orig_shape)


@jax.custom_vjp
def _binary_tanh(x):
    return _binary_tanh_forward(x)


def _binary_tanh_fwd(x):
    return _binary_tanh_forward(x), x


def _binary_tanh_bwd(x, g):
    # PyTorch module = binarizeTanh(tanh(x)); binarize backward is the
    # straight-through identity, so d/dx through the module = 1 - tanh(x)^2.
    t = jnp.tanh(x.astype(jnp.float32))
    return ((g.astype(jnp.float32) * (1.0 - t * t)).astype(g.dtype),)


_binary_tanh.defvjp(_binary_tanh_fwd, _binary_tanh_bwd)

binary_tanh = jax.jit(_binary_tanh)


if __name__ == "__main__":
    key = jax.random.PRNGKey(0)
    k0, k1, k2, k3 = jax.random.split(key, 4)

    # NCHW activation like the PyTorch module sees: batch=2, C=4, H=W=16
    x = jax.random.normal(k0, (2, 4, 16, 16), dtype=jnp.float32)
    y = jax.block_until_ready(binary_tanh(x))
    ref = jnp.where(jnp.tanh(x) >= 0, 1.0, -1.0).astype(x.dtype)
    assert y.shape == x.shape and y.dtype == x.dtype
    assert bool(jnp.all(y == ref))
    assert bool(jnp.all((y == 1.0) | (y == -1.0)))

    # numel % 128 == 0 but not % 1024: exercises the 128-lane slab path
    x1 = jax.random.normal(k1, (8, 48), dtype=jnp.float32)        # 384 elements
    y1 = jax.block_until_ready(binary_tanh(x1))
    assert bool(jnp.all(y1 == jnp.where(x1 >= 0, 1.0, -1.0)))

    # fully unaligned numel: exercises the copy-free 1-D path (no pad / slice)
    x2 = jax.random.normal(k2, (3, 5, 7), dtype=jnp.float32)      # 105 elements
    y2 = jax.block_until_ready(binary_tanh(x2))
    assert y2.shape == x2.shape
    assert bool(jnp.all(y2 == jnp.where(x2 >= 0, 1.0, -1.0)))

    # bf16 stays bf16 (byte-targeted tiling keeps tile bytes constant)
    xb = jax.random.normal(k3, (2, 4, 16, 16)).astype(jnp.bfloat16)
    yb = jax.block_until_ready(binary_tanh(xb))
    refb = jnp.where(xb >= 0, 1, -1).astype(jnp.bfloat16)
    assert yb.dtype == jnp.bfloat16 and bool(jnp.all(yb == refb))

    # gradient matches PyTorch autodiff through the module (STE on binarize)
    g = jax.block_until_ready(jax.grad(lambda v: jnp.sum(binary_tanh(v)))(x))
    g_ref = 1.0 - jnp.tanh(x) ** 2
    assert bool(jnp.allclose(g, g_ref, atol=1e-6))

    print("KERNEL_OK")
</pallas_src>

<mosaic_0001>
module attributes {stable_mosaic.version = 11 : i64} {
  func.func @_binary_tanh_kernel(%arg0: i32, %arg1: memref<2x1024xf32, #tpu.memory_space<vmem>>, %arg2: memref<2x1024xf32, #tpu.memory_space<vmem>>) attributes {dimension_semantics = [#tpu.dimension_semantics<parallel>], iteration_bounds = array<i64: 1>, scalar_prefetch = 0 : i64, scratch_operands = 0 : i64, tpu.core_type = #tpu.core_type<tc>, window_params = [{transform_indices = @transform_0, window_bounds = array<i64: 2, 1024>}, {transform_indices = @transform_1, window_bounds = array<i64: 2, 1024>}]} {
    %c0 = arith.constant 0 : index
    %c0_0 = arith.constant 0 : index
    %0 = vector.load %arg1[%c0, %c0_0] : memref<2x1024xf32, #tpu.memory_space<vmem>>, vector<2x1024xf32>
    %cst = arith.constant 0.000000e+00 : f32
    %1 = vector.broadcast %cst : f32 to vector<2x1024xf32>
    %2 = arith.cmpf oge, %0, %1 : vector<2x1024xf32>
    %cst_1 = arith.constant 0.000000e+00 : f32
    %cst_2 = arith.constant 1.000000e+00 : f32
    %3 = arith.subf %cst_1, %cst_2 : f32
    %cst_3 = arith.constant 1.000000e+00 : f32
    %4 = vector.broadcast %cst_3 : f32 to vector<2x1024xf32>
    %5 = vector.broadcast %3 : f32 to vector<2x1024xf32>
    %6 = arith.select %2, %4, %5 : vector<2x1024xi1>, vector<2x1024xf32>
    %c0_4 = arith.constant 0 : index
    %c0_5 = arith.constant 0 : index
    %7 = vector.load %arg2[%c0_4, %c0_5] : memref<2x1024xf32, #tpu.memory_space<vmem>>, vector<2x1024xf32>
    tpu.vector_store %arg2[%c0_4, %c0_5], %6 {strides = array<i32>} : memref<2x1024xf32, #tpu.memory_space<vmem>>, vector<2x1024xf32>,
    return
  }
  func.func @transform_0(%arg0: i32) -> (i32, i32) {
    %c0_i32 = arith.constant 0 : i32
    %c0_i32_0 = arith.constant 0 : i32
    return %arg0, %c0_i32 : i32, i32
  }
  func.func @transform_1(%arg0: i32) -> (i32, i32) {
    %c0_i32 = arith.constant 0 : i32
    %c0_i32_0 = arith.constant 0 : i32
    return %arg0, %c0_i32 : i32, i32
  }
}

</mosaic_0001>

<llo_original>
// kernel: _binary_tanh.1
$region0: #{_binary_tanh.1}
  #allocation0 [shape = 'u32[]', space=smem, size = 0x4, offset = 0x4, fixed_abs, tag = 'smem constant byte address 0x4 - core index']
  #allocation1 [shape = 'u32[144,128]{1,0:T(1,128)}', space=vmem, size = 0x12000, scoped, tag = 'internal scratch']
  %s0 = inlined_call_operand.vmem [shape: f32[2,1024], index: 0, kind: input, shape index: {}]
  %s1 = inlined_call_operand.vmem [shape: f32[2,1024], index: 1, kind: output, shape index: {}]
  %s2 = sld [smem:[#allocation0]]
  $region14: #{_binary_tanh.1} parent=0
    _
  %s4 = ssub.s32 1, %s2
  %s5 = scalar_select 0, %s4, %s2
  // Predicated region
  $region2: #{_binary_tanh.1} parent=0 // pred_check
    _
  $region3: #{_binary_tanh.1} parent=0 // pred_check_branch
    %7 = sbr.rel (0) target = $region5
  $region4: #{_binary_tanh.1} parent=0 // pred_region
    _
  $region5: #{_binary_tanh.1} parent=0 // pred_fallthru
    _
  %v8 = vld [vmem:[%s0] sm:$0xff]
  %v9 = vld [vmem:[%s0 + $0x8] sm:$0xff]
  %vm10 = vcmp.ge.f32.partialorder %v8, 0.0
  %vm11 = vcmp.ge.f32.partialorder %v9, 0.0
  %v12 = vsel %vm10, 1.0, -1.0
  %v13 = vsel %vm11, 1.0, -1.0
  %14 = vst [vmem:[%s1] sm:$0xff] %v12
  %15 = vst [vmem:[%s1 + $0x8] sm:$0xff] %v13
  // Predicated region
  $region6: #{_binary_tanh.1} parent=0 // pred_check
    _
  $region7: #{_binary_tanh.1} parent=0 // pred_check_branch
    %17 = sbr.rel (0) target = $region9
  $region8: #{_binary_tanh.1} parent=0 // pred_region
    _
  $region9: #{_binary_tanh.1} parent=0 // pred_fallthru
    _
  // Predicated region
  $region10: #{_binary_tanh.1} parent=0 // pred_check
    _
  $region11: #{_binary_tanh.1} parent=0 // pred_check_branch
    %19 = sbr.rel (0) target = $region13
  $region12: #{_binary_tanh.1} parent=0 // pred_region
    _
  $region13: #{_binary_tanh.1} parent=0 // pred_fallthru
    _

</llo_original>
